<compile_context>
chip_gen: v7x
topology: tpu7x:2x2x1
jax: 0.10.0
libtpu: 0.0.40
codegen_flags: <defaults>
</compile_context>

<pallas_src>
import functools
import jax
import jax.numpy as jnp
import numpy as np
from jax.experimental import pallas as pl
from jax.experimental.pallas import tpu as pltpu

# ---- small deterministic configuration (consistent with the module) --------
BATCH = 2
IN_CH = 3
IMG_H = IMG_W = 32
NUM_FEAT = 128              # num_init_features (multiple of 128 -> lane-dense)
KH = KW = 7
CONV_STRIDE = 2
CONV_PAD = 1
POOL_K = 3
POOL_STRIDE = 2
POOL_PAD = 1
BN_EPS = 1e-5

OH = (IMG_H + 2 * CONV_PAD - KH) // CONV_STRIDE + 1       # 14
OW = (IMG_W + 2 * CONV_PAD - KW) // CONV_STRIDE + 1       # 14
PH = (OH + 2 * POOL_PAD - POOL_K) // POOL_STRIDE + 1      # 7
PW = (OW + 2 * POOL_PAD - POOL_K) // POOL_STRIDE + 1      # 7
HP = OH + 2 * POOL_PAD                                    # 16 (pool-padded grid)
WP = OW + 2 * POOL_PAD                                    # 16
K_IM2COL = KH * KW * IN_CH                                # 147

assert HP % 2 == 0 and WP % 2 == 0
assert HP // 2 >= PH + 1 and WP // 2 >= PW + 1


# ---------------------------------------------------------------------------
# Fused conv(matmul) + BN + ReLU + maxpool kernel (single grid step)
# ---------------------------------------------------------------------------
def _fused_kernel(p_ref, w_ref, scale_ref, shift_ref, mask_ref, out_ref, *,
                  batch, hp2, wp2, ph, pw, cout):
    # Conv as one MXU matmul: [B*HP*WP, K] @ [K, C] -> [B*HP*WP, C]
    conv = jnp.dot(p_ref[...], w_ref[...], preferred_element_type=jnp.float32)
    # Eval-mode BatchNorm folded to per-channel scale/shift, then ReLU.
    y = jnp.maximum(conv * scale_ref[...] + shift_ref[...], 0.0)
    # Zero the pool-padding border rows.  Post-ReLU values are >= 0, so a zero
    # border is equivalent to PyTorch's -inf padding in MaxPool2d.
    y = y * mask_ref[...]
    # Parity-split view: [B, row_parity, row_half, col_parity, col_half, C].
    # Last two dims are (wp2=8, C=128) -> this reshape is tile-exact.
    yv = y.reshape(batch, 2, hp2, 2, wp2, cout)

    def window(rpar, roff, cpar, coff):
        return yv[:, rpar, roff:roff + ph, cpar, coff:coff + pw, :]

    # 3x3 / stride-2 max pool = elementwise max of 9 unit-stride slices.
    pooled = window(0, 0, 0, 0)
    for rpar, roff, cpar, coff in ((0, 0, 1, 0), (0, 0, 0, 1),
                                   (1, 0, 0, 0), (1, 0, 1, 0), (1, 0, 0, 1),
                                   (0, 1, 0, 0), (0, 1, 1, 0), (0, 1, 0, 1)):
        pooled = jnp.maximum(pooled, window(rpar, roff, cpar, coff))
    out_ref[...] = pooled.astype(out_ref.dtype)


# ---------------------------------------------------------------------------
# Wrapper: layout plumbing (im2col + parity/pad ordering) + pallas_call
# ---------------------------------------------------------------------------
def _im2col_parity(img):
    """NCHW image -> (patches [B*HP*WP, K], interior mask [B*HP*WP, 1])."""
    b = img.shape[0]
    x = jnp.transpose(img, (0, 2, 3, 1))                               # NHWC
    x = jnp.pad(x, ((0, 0), (CONV_PAD,) * 2, (CONV_PAD,) * 2, (0, 0)))
    cols = []
    for kh in range(KH):
        for kw in range(KW):
            cols.append(x[:, kh:kh + CONV_STRIDE * OH:CONV_STRIDE,
                            kw:kw + CONV_STRIDE * OW:CONV_STRIDE, :])
    patches = jnp.concatenate(cols, axis=-1)                           # [B,OH,OW,K]

    def pad_and_reorder(t):
        c = t.shape[-1]
        full = jnp.zeros((b, HP, WP, c), t.dtype)
        full = full.at[:, POOL_PAD:POOL_PAD + OH, POOL_PAD:POOL_PAD + OW, :].set(t)
        full = full.reshape(b, HP // 2, 2, WP // 2, 2, c)   # (b, hr, pr, hc, pc, c)
        full = jnp.transpose(full, (0, 2, 1, 4, 3, 5))      # (b, pr, hr, pc, hc, c)
        return full.reshape(b * HP * WP, c)

    patches_flat = pad_and_reorder(patches)
    mask = pad_and_reorder(jnp.ones((b, OH, OW, 1), jnp.float32))
    return patches_flat, mask


@jax.jit
def fc_image_encoder_forward(img, conv_w, bn_gamma, bn_beta, bn_mean, bn_var):
    """Fused FCImageEncoder forward.  conv_w is PyTorch layout [Cout,Cin,KH,KW].
    Returns NCHW [B, Cout, PH, PW], like the nn.Module."""
    b = img.shape[0]
    patches, mask = _im2col_parity(img)
    w_mat = jnp.transpose(conv_w, (2, 3, 1, 0)).reshape(K_IM2COL, NUM_FEAT)
    scale = (bn_gamma * jax.lax.rsqrt(bn_var + BN_EPS)).reshape(1, NUM_FEAT)
    shift = (bn_beta - bn_mean * scale[0]).reshape(1, NUM_FEAT)

    kernel = functools.partial(_fused_kernel, batch=b, hp2=HP // 2, wp2=WP // 2,
                               ph=PH, pw=PW, cout=NUM_FEAT)
    out_nhwc = pl.pallas_call(
        kernel,
        out_shape=jax.ShapeDtypeStruct((b, PH, PW, NUM_FEAT), jnp.float32),
        grid=(1,),
        in_specs=[
            pl.BlockSpec((b * HP * WP, K_IM2COL), lambda i: (0, 0)),   # patches
            pl.BlockSpec((K_IM2COL, NUM_FEAT), lambda i: (0, 0)),      # conv weight
            pl.BlockSpec((1, NUM_FEAT), lambda i: (0, 0)),             # BN scale
            pl.BlockSpec((1, NUM_FEAT), lambda i: (0, 0)),             # BN shift
            pl.BlockSpec((b * HP * WP, 1), lambda i: (0, 0)),          # interior mask
        ],
        out_specs=pl.BlockSpec((b, PH, PW, NUM_FEAT), lambda i: (0, 0, 0, 0)),
        compiler_params=pltpu.CompilerParams(dimension_semantics=("arbitrary",)),
    )(patches, w_mat, scale, shift, mask)
    return jnp.transpose(out_nhwc, (0, 3, 1, 2))   # NCHW, like PyTorch


# ---------------------------------------------------------------------------
# Pure-JAX reference (conv + eval-mode BN + ReLU + maxpool)
# ---------------------------------------------------------------------------
def fc_image_encoder_ref(img, conv_w, gamma, beta, mean, var):
    conv = jax.lax.conv_general_dilated(
        img, conv_w, window_strides=(CONV_STRIDE, CONV_STRIDE),
        padding=((CONV_PAD, CONV_PAD), (CONV_PAD, CONV_PAD)),
        dimension_numbers=("NCHW", "OIHW", "NCHW"))
    inv = jax.lax.rsqrt(var + BN_EPS)
    y = (conv - mean[None, :, None, None]) * (gamma * inv)[None, :, None, None] \
        + beta[None, :, None, None]
    y = jnp.maximum(y, 0.0)
    return jax.lax.reduce_window(
        y, -jnp.inf, jax.lax.max,
        window_dimensions=(1, 1, POOL_K, POOL_K),
        window_strides=(1, 1, POOL_STRIDE, POOL_STRIDE),
        padding=((0, 0), (0, 0), (POOL_PAD, POOL_PAD), (POOL_PAD, POOL_PAD)))


# ---------------------------------------------------------------------------
if __name__ == "__main__":
    key = jax.random.PRNGKey(0)
    k_img, k_w, k_g, k_b, k_m, k_v = jax.random.split(key, 6)

    img = jax.random.normal(k_img, (BATCH, IN_CH, IMG_H, IMG_W), jnp.float32)
    conv_w = 0.05 * jax.random.normal(k_w, (NUM_FEAT, IN_CH, KH, KW), jnp.float32)
    bn_gamma = 1.0 + 0.2 * jax.random.normal(k_g, (NUM_FEAT,), jnp.float32)
    bn_beta = 0.1 * jax.random.normal(k_b, (NUM_FEAT,), jnp.float32)
    bn_mean = 0.1 * jax.random.normal(k_m, (NUM_FEAT,), jnp.float32)
    bn_var = jax.random.uniform(k_v, (NUM_FEAT,), jnp.float32, 0.5, 1.5)

    out = fc_image_encoder_forward(img, conv_w, bn_gamma, bn_beta, bn_mean, bn_var)
    out = jax.block_until_ready(out)

    ref = fc_image_encoder_ref(img, conv_w, bn_gamma, bn_beta, bn_mean, bn_var)
    np.testing.assert_allclose(np.asarray(out), np.asarray(ref),
                               rtol=1e-4, atol=1e-4)
    print("KERNEL_OK")
</pallas_src>

<mosaic_0001>
module attributes {stable_mosaic.version = 11 : i64} {
  func.func @_fused_kernel(%arg0: i32, %arg1: memref<512x147xf32, #tpu.memory_space<vmem>>, %arg2: memref<147x128xf32, #tpu.memory_space<vmem>>, %arg3: memref<1x128xf32, #tpu.memory_space<vmem>>, %arg4: memref<1x128xf32, #tpu.memory_space<vmem>>, %arg5: memref<512x1xf32, #tpu.memory_space<vmem>>, %arg6: memref<2x7x7x128xf32, #tpu.memory_space<vmem>>) attributes {dimension_semantics = [#tpu.dimension_semantics<arbitrary>], iteration_bounds = array<i64: 1>, scalar_prefetch = 0 : i64, scratch_operands = 0 : i64, tpu.core_type = #tpu.core_type<tc>, window_params = [{pipeline_mode = #tpu.pipeline_mode<synchronous>, transform_indices = @transform_0, window_bounds = array<i64: 512, 147>}, {pipeline_mode = #tpu.pipeline_mode<synchronous>, transform_indices = @transform_1, window_bounds = array<i64: 147, 128>}, {pipeline_mode = #tpu.pipeline_mode<synchronous>, transform_indices = @transform_2, window_bounds = array<i64: 1, 128>}, {pipeline_mode = #tpu.pipeline_mode<synchronous>, transform_indices = @transform_3, window_bounds = array<i64: 1, 128>}, {pipeline_mode = #tpu.pipeline_mode<synchronous>, transform_indices = @transform_4, window_bounds = array<i64: 512, 1>}, {pipeline_mode = #tpu.pipeline_mode<synchronous>, transform_indices = @transform_5, window_bounds = array<i64: 2, 7, 7, 128>}]} {
    %c0 = arith.constant 0 : index
    %c0_0 = arith.constant 0 : index
    %0 = vector.load %arg1[%c0, %c0_0] : memref<512x147xf32, #tpu.memory_space<vmem>>, vector<512x147xf32>
    %c0_1 = arith.constant 0 : index
    %c0_2 = arith.constant 0 : index
    %1 = vector.load %arg2[%c0_1, %c0_2] : memref<147x128xf32, #tpu.memory_space<vmem>>, vector<147x128xf32>
    %cst = arith.constant dense<0.000000e+00> : vector<512x128xf32>
    %2 = tpu.matmul %0, %1, %cst {dimension_numbers = #tpu.dot_dimension_numbers<[1], [0], [0], [1], [0, 0, 1, 1], [], []>} : vector<512x147xf32>, vector<147x128xf32>, vector<512x128xf32> -> vector<512x128xf32>
    %c0_3 = arith.constant 0 : index
    %c0_4 = arith.constant 0 : index
    %3 = vector.load %arg3[%c0_3, %c0_4] : memref<1x128xf32, #tpu.memory_space<vmem>>, vector<1x128xf32>
    %4 = vector.broadcast %3 : vector<1x128xf32> to vector<512x128xf32>
    %5 = arith.mulf %2, %4 : vector<512x128xf32>
    %c0_5 = arith.constant 0 : index
    %c0_6 = arith.constant 0 : index
    %6 = vector.load %arg4[%c0_5, %c0_6] : memref<1x128xf32, #tpu.memory_space<vmem>>, vector<1x128xf32>
    %7 = vector.broadcast %6 : vector<1x128xf32> to vector<512x128xf32>
    %8 = arith.addf %5, %7 : vector<512x128xf32>
    %cst_7 = arith.constant 0.000000e+00 : f32
    %9 = vector.broadcast %cst_7 : f32 to vector<512x128xf32>
    %10 = arith.maximumf %8, %9 : vector<512x128xf32>
    %c0_8 = arith.constant 0 : index
    %c0_9 = arith.constant 0 : index
    %11 = vector.load %arg5[%c0_8, %c0_9] : memref<512x1xf32, #tpu.memory_space<vmem>>, vector<512x1xf32>
    %12 = vector.broadcast %11 : vector<512x1xf32> to vector<512x128xf32>
    %13 = arith.mulf %10, %12 : vector<512x128xf32>
    %14 = vector.shape_cast %13 : vector<512x128xf32> to vector<2x2x8x2x8x128xf32>
    %15 = vector.extract_strided_slice %14 {offsets = [0, 0, 0, 0, 0, 0], sizes = [2, 1, 7, 1, 7, 128], strides = [1, 1, 1, 1, 1, 1]} : vector<2x2x8x2x8x128xf32> to vector<2x1x7x1x7x128xf32>
    %16 = vector.shape_cast %15 : vector<2x1x7x1x7x128xf32> to vector<2x7x7x128xf32>
    %17 = vector.extract_strided_slice %14 {offsets = [0, 0, 0, 1, 0, 0], sizes = [2, 1, 7, 1, 7, 128], strides = [1, 1, 1, 1, 1, 1]} : vector<2x2x8x2x8x128xf32> to vector<2x1x7x1x7x128xf32>
    %18 = vector.shape_cast %17 : vector<2x1x7x1x7x128xf32> to vector<2x7x7x128xf32>
    %19 = arith.maximumf %16, %18 : vector<2x7x7x128xf32>
    %20 = vector.extract_strided_slice %14 {offsets = [0, 0, 0, 0, 1, 0], sizes = [2, 1, 7, 1, 7, 128], strides = [1, 1, 1, 1, 1, 1]} : vector<2x2x8x2x8x128xf32> to vector<2x1x7x1x7x128xf32>
    %21 = vector.shape_cast %20 : vector<2x1x7x1x7x128xf32> to vector<2x7x7x128xf32>
    %22 = arith.maximumf %19, %21 : vector<2x7x7x128xf32>
    %23 = vector.extract_strided_slice %14 {offsets = [0, 1, 0, 0, 0, 0], sizes = [2, 1, 7, 1, 7, 128], strides = [1, 1, 1, 1, 1, 1]} : vector<2x2x8x2x8x128xf32> to vector<2x1x7x1x7x128xf32>
    %24 = vector.shape_cast %23 : vector<2x1x7x1x7x128xf32> to vector<2x7x7x128xf32>
    %25 = arith.maximumf %22, %24 : vector<2x7x7x128xf32>
    %26 = vector.extract_strided_slice %14 {offsets = [0, 1, 0, 1, 0, 0], sizes = [2, 1, 7, 1, 7, 128], strides = [1, 1, 1, 1, 1, 1]} : vector<2x2x8x2x8x128xf32> to vector<2x1x7x1x7x128xf32>
    %27 = vector.shape_cast %26 : vector<2x1x7x1x7x128xf32> to vector<2x7x7x128xf32>
    %28 = arith.maximumf %25, %27 : vector<2x7x7x128xf32>
    %29 = vector.extract_strided_slice %14 {offsets = [0, 1, 0, 0, 1, 0], sizes = [2, 1, 7, 1, 7, 128], strides = [1, 1, 1, 1, 1, 1]} : vector<2x2x8x2x8x128xf32> to vector<2x1x7x1x7x128xf32>
    %30 = vector.shape_cast %29 : vector<2x1x7x1x7x128xf32> to vector<2x7x7x128xf32>
    %31 = arith.maximumf %28, %30 : vector<2x7x7x128xf32>
    %32 = vector.extract_strided_slice %14 {offsets = [0, 0, 1, 0, 0, 0], sizes = [2, 1, 7, 1, 7, 128], strides = [1, 1, 1, 1, 1, 1]} : vector<2x2x8x2x8x128xf32> to vector<2x1x7x1x7x128xf32>
    %33 = vector.shape_cast %32 : vector<2x1x7x1x7x128xf32> to vector<2x7x7x128xf32>
    %34 = arith.maximumf %31, %33 : vector<2x7x7x128xf32>
    %35 = vector.extract_strided_slice %14 {offsets = [0, 0, 1, 1, 0, 0], sizes = [2, 1, 7, 1, 7, 128], strides = [1, 1, 1, 1, 1, 1]} : vector<2x2x8x2x8x128xf32> to vector<2x1x7x1x7x128xf32>
    %36 = vector.shape_cast %35 : vector<2x1x7x1x7x128xf32> to vector<2x7x7x128xf32>
    %37 = arith.maximumf %34, %36 : vector<2x7x7x128xf32>
    %38 = vector.extract_strided_slice %14 {offsets = [0, 0, 1, 0, 1, 0], sizes = [2, 1, 7, 1, 7, 128], strides = [1, 1, 1, 1, 1, 1]} : vector<2x2x8x2x8x128xf32> to vector<2x1x7x1x7x128xf32>
    %39 = vector.shape_cast %38 : vector<2x1x7x1x7x128xf32> to vector<2x7x7x128xf32>
    %40 = arith.maximumf %37, %39 : vector<2x7x7x128xf32>
    %c0_10 = arith.constant 0 : index
    %c0_11 = arith.constant 0 : index
    %c0_12 = arith.constant 0 : index
    %c0_13 = arith.constant 0 : index
    %41 = vector.load %arg6[%c0_10, %c0_11, %c0_12, %c0_13] : memref<2x7x7x128xf32, #tpu.memory_space<vmem>>, vector<2x7x7x128xf32>
    tpu.vector_store %arg6[%c0_10, %c0_11, %c0_12, %c0_13], %40 {strides = array<i32>} : memref<2x7x7x128xf32, #tpu.memory_space<vmem>>, vector<2x7x7x128xf32>,
    return
  }
  func.func @transform_0(%arg0: i32) -> (i32, i32) {
    %c0_i32 = arith.constant 0 : i32
    %c0_i32_0 = arith.constant 0 : i32
    %c0_i32_1 = arith.constant 0 : i32
    return %c0_i32, %c0_i32_0 : i32, i32
  }
  func.func @transform_1(%arg0: i32) -> (i32, i32) {
    %c0_i32 = arith.constant 0 : i32
    %c0_i32_0 = arith.constant 0 : i32
    %c0_i32_1 = arith.constant 0 : i32
    return %c0_i32, %c0_i32_0 : i32, i32
  }
  func.func @transform_2(%arg0: i32) -> (i32, i32) {
    %c0_i32 = arith.constant 0 : i32
    %c0_i32_0 = arith.constant 0 : i32
    %c0_i32_1 = arith.constant 0 : i32
    return %c0_i32, %c0_i32_0 : i32, i32
  }
  func.func @transform_3(%arg0: i32) -> (i32, i32) {
    %c0_i32 = arith.constant 0 : i32
    %c0_i32_0 = arith.constant 0 : i32
    %c0_i32_1 = arith.constant 0 : i32
    return %c0_i32, %c0_i32_0 : i32, i32
  }
  func.func @transform_4(%arg0: i32) -> (i32, i32) {
    %c0_i32 = arith.constant 0 : i32
    %c0_i32_0 = arith.constant 0 : i32
    %c0_i32_1 = arith.constant 0 : i32
    return %c0_i32, %c0_i32_0 : i32, i32
  }
  func.func @transform_5(%arg0: i32) -> (i32, i32, i32, i32) {
    %c0_i32 = arith.constant 0 : i32
    %c0_i32_0 = arith.constant 0 : i32
    %c0_i32_1 = arith.constant 0 : i32
    %c0_i32_2 = arith.constant 0 : i32
    %c0_i32_3 = arith.constant 0 : i32
    return %c0_i32, %c0_i32_0, %c0_i32_1, %c0_i32_2 : i32, i32, i32, i32
  }
}

</mosaic_0001>

<llo_original>
// kernel: fc_image_encoder_forward.1
$region0: #{fc_image_encoder_forward.1}
  #allocation0 [shape = 'u32[]', space=smem, size = 0x4, offset = 0x4, fixed_abs, tag = 'smem constant byte address 0x4 - core index']
  #allocation1 [shape = 'u32[144,128]{1,0:T(1,128)}', space=vmem, size = 0x12000, scoped, tag = 'internal scratch']
  %s0 = inlined_call_operand.vmem [shape: f32[512,147], index: 0, kind: input, shape index: {}]
  %s1 = inlined_call_operand.vmem [shape: f32[147,128], index: 1, kind: input, shape index: {}]
  %s2 = inlined_call_operand.vmem [shape: f32[1,128], index: 2, kind: input, shape index: {}]
  %s3 = inlined_call_operand.vmem [shape: f32[1,128], index: 3, kind: input, shape index: {}]
  %s4 = inlined_call_operand.vmem [shape: f32[512,1], index: 4, kind: input, shape index: {}]
  %s5 = inlined_call_operand.vmem [shape: f32[2,7,7,128], index: 5, kind: output, shape index: {}]
  %s6 = sld [smem:[#allocation0]]
  $region30: #{fc_image_encoder_forward.1} parent=0
    _
  %s8 = ssub.s32 1, %s6
  %s9 = scalar_select 0, %s8, %s6
  // Predicated region
  $region2: #{fc_image_encoder_forward.1} parent=0 // pred_check
    _
  $region3: #{fc_image_encoder_forward.1} parent=0 // pred_check_branch
    %11 = sbr.rel (0) target = $region5
  $region4: #{fc_image_encoder_forward.1} parent=0 // pred_region
    _
  $region5: #{fc_image_encoder_forward.1} parent=0 // pred_fallthru
    _
  // Predicated region
  $region6: #{fc_image_encoder_forward.1} parent=0 // pred_check
    _
  $region7: #{fc_image_encoder_forward.1} parent=0 // pred_check_branch
    %13 = sbr.rel (0) target = $region9
  $region8: #{fc_image_encoder_forward.1} parent=0 // pred_region
    _
  $region9: #{fc_image_encoder_forward.1} parent=0 // pred_fallthru
    _
  // Predicated region
  $region10: #{fc_image_encoder_forward.1} parent=0 // pred_check
    _
  $region11: #{fc_image_encoder_forward.1} parent=0 // pred_check_branch
    %15 = sbr.rel (0) target = $region13
  $region12: #{fc_image_encoder_forward.1} parent=0 // pred_region
    _
  $region13: #{fc_image_encoder_forward.1} parent=0 // pred_fallthru
    _
  // Predicated region
  $region14: #{fc_image_encoder_forward.1} parent=0 // pred_check
    _
  $region15: #{fc_image_encoder_forward.1} parent=0 // pred_check_branch
    %17 = sbr.rel (0) target = $region17
  $region16: #{fc_image_encoder_forward.1} parent=0 // pred_region
    _
  $region17: #{fc_image_encoder_forward.1} parent=0 // pred_fallthru
    _
  // Predicated region
  $region18: #{fc_image_encoder_forward.1} parent=0 // pred_check
    _
  $region19: #{fc_image_encoder_forward.1} parent=0 // pred_check_branch
    %19 = sbr.rel (0) target = $region21
  $region20: #{fc_image_encoder_forward.1} parent=0 // pred_region
    _
  $region21: #{fc_image_encoder_forward.1} parent=0 // pred_fallthru
    _
  %v20 = vld [vmem:[%s0] sm:$0xff]
  %v21 = vld [vmem:[%s0 + $0x8] sm:$0xff]
  %v22 = vld [vmem:[%s0 + $0x10] sm:$0xff]
  %v23 = vld [vmem:[%s0 + $0x18] sm:$0xff]
  %v24 = vld [vmem:[%s0 + $0x20] sm:$0xff]
  %v25 = vld [vmem:[%s0 + $0x28] sm:$0xff]
  %v26 = vld [vmem:[%s0 + $0x30] sm:$0xff]
  %v27 = vld [vmem:[%s0 + $0x38] sm:$0xff]
  %v28 = vld [vmem:[%s0 + $0x40] sm:$0xff]
  %v29 = vld [vmem:[%s0 + $0x48] sm:$0xff]
  %v30 = vld [vmem:[%s0 + $0x50] sm:$0xff]
  %v31 = vld [vmem:[%s0 + $0x58] sm:$0xff]
  %v32 = vld [vmem:[%s0 + $0x60] sm:$0xff]
  %v33 = vld [vmem:[%s0 + $0x68] sm:$0xff]
  %v34 = vld [vmem:[%s0 + $0x70] sm:$0xff]
  %v35 = vld [vmem:[%s0 + $0x78] sm:$0xff]
  %v36 = vld [vmem:[%s0 + $0x80] sm:$0xff]
  %v37 = vld [vmem:[%s0 + $0x88] sm:$0xff]
  %v38 = vld [vmem:[%s0 + $0x90] sm:$0xff]
  %v39 = vld [vmem:[%s0 + $0x98] sm:$0xff]
  %v40 = vld [vmem:[%s0 + $0xa0] sm:$0xff]
  %v41 = vld [vmem:[%s0 + $0xa8] sm:$0xff]
  %v42 = vld [vmem:[%s0 + $0xb0] sm:$0xff]
  %v43 = vld [vmem:[%s0 + $0xb8] sm:$0xff]
  %v44 = vld [vmem:[%s0 + $0xc0] sm:$0xff]
  %v45 = vld [vmem:[%s0 + $0xc8] sm:$0xff]
  %v46 = vld [vmem:[%s0 + $0xd0] sm:$0xff]
  %v47 = vld [vmem:[%s0 + $0xd8] sm:$0xff]
  %v48 = vld [vmem:[%s0 + $0xe0] sm:$0xff]
  %v49 = vld [vmem:[%s0 + $0xe8] sm:$0xff]
  %v50 = vld [vmem:[%s0 + $0xf0] sm:$0xff]
  %v51 = vld [vmem:[%s0 + $0xf8] sm:$0xff]
  %v52 = vld [vmem:[%s0 + $0x100] sm:$0xff]
  %v53 = vld [vmem:[%s0 + $0x108] sm:$0xff]
  %v54 = vld [vmem:[%s0 + $0x110] sm:$0xff]
  %v55 = vld [vmem:[%s0 + $0x118] sm:$0xff]
  %v56 = vld [vmem:[%s0 + $0x120] sm:$0xff]
  %v57 = vld [vmem:[%s0 + $0x128] sm:$0xff]
  %v58 = vld [vmem:[%s0 + $0x130] sm:$0xff]
  %v59 = vld [vmem:[%s0 + $0x138] sm:$0xff]
  %v60 = vld [vmem:[%s0 + $0x140] sm:$0xff]
  %v61 = vld [vmem:[%s0 + $0x148] sm:$0xff]
  %v62 = vld [vmem:[%s0 + $0x150] sm:$0xff]
  %v63 = vld [vmem:[%s0 + $0x158] sm:$0xff]
  %v64 = vld [vmem:[%s0 + $0x160] sm:$0xff]
  %v65 = vld [vmem:[%s0 + $0x168] sm:$0xff]
  %v66 = vld [vmem:[%s0 + $0x170] sm:$0xff]
  %v67 = vld [vmem:[%s0 + $0x178] sm:$0xff]
  %v68 = vld [vmem:[%s0 + $0x180] sm:$0xff]
  %v69 = vld [vmem:[%s0 + $0x188] sm:$0xff]
  %v70 = vld [vmem:[%s0 + $0x190] sm:$0xff]
  %v71 = vld [vmem:[%s0 + $0x198] sm:$0xff]
  %v72 = vld [vmem:[%s0 + $0x1a0] sm:$0xff]
  %v73 = vld [vmem:[%s0 + $0x1a8] sm:$0xff]
  %v74 = vld [vmem:[%s0 + $0x1b0] sm:$0xff]
  %v75 = vld [vmem:[%s0 + $0x1b8] sm:$0xff]
  %v76 = vld [vmem:[%s0 + $0x1c0] sm:$0xff]
  %v77 = vld [vmem:[%s0 + $0x1c8] sm:$0xff]
  %v78 = vld [vmem:[%s0 + $0x1d0] sm:$0xff]
  %v79 = vld [vmem:[%s0 + $0x1d8] sm:$0xff]
  %v80 = vld [vmem:[%s0 + $0x1e0] sm:$0xff]
  %v81 = vld [vmem:[%s0 + $0x1e8] sm:$0xff]
  %v82 = vld [vmem:[%s0 + $0x1f0] sm:$0xff]
  %v83 = vld [vmem:[%s0 + $0x1f8] sm:$0xff]
  %v84 = vld [vmem:[%s0 + $0x200] sm:$0xff]
  %v85 = vld [vmem:[%s0 + $0x208] sm:$0xff]
  %v86 = vld [vmem:[%s0 + $0x210] sm:$0xff]
  %v87 = vld [vmem:[%s0 + $0x218] sm:$0xff]
  %v88 = vld [vmem:[%s0 + $0x220] sm:$0xff]
  %v89 = vld [vmem:[%s0 + $0x228] sm:$0xff]
  %v90 = vld [vmem:[%s0 + $0x230] sm:$0xff]
  %v91 = vld [vmem:[%s0 + $0x238] sm:$0xff]
  %v92 = vld [vmem:[%s0 + $0x240] sm:$0xff]
  %v93 = vld [vmem:[%s0 + $0x248] sm:$0xff]
  %v94 = vld [vmem:[%s0 + $0x250] sm:$0xff]
  %v95 = vld [vmem:[%s0 + $0x258] sm:$0xff]
  %v96 = vld [vmem:[%s0 + $0x260] sm:$0xff]
  %v97 = vld [vmem:[%s0 + $0x268] sm:$0xff]
  %v98 = vld [vmem:[%s0 + $0x270] sm:$0xff]
  %v99 = vld [vmem:[%s0 + $0x278] sm:$0xff]
  %v100 = vld [vmem:[%s0 + $0x280] sm:$0xff]
  %v101 = vld [vmem:[%s0 + $0x288] sm:$0xff]
  %v102 = vld [vmem:[%s0 + $0x290] sm:$0xff]
  %v103 = vld [vmem:[%s0 + $0x298] sm:$0xff]
  %v104 = vld [vmem:[%s0 + $0x2a0] sm:$0xff]
  %v105 = vld [vmem:[%s0 + $0x2a8] sm:$0xff]
  %v106 = vld [vmem:[%s0 + $0x2b0] sm:$0xff]
  %v107 = vld [vmem:[%s0 + $0x2b8] sm:$0xff]
  %v108 = vld [vmem:[%s0 + $0x2c0] sm:$0xff]
  %v109 = vld [vmem:[%s0 + $0x2c8] sm:$0xff]
  %v110 = vld [vmem:[%s0 + $0x2d0] sm:$0xff]
  %v111 = vld [vmem:[%s0 + $0x2d8] sm:$0xff]
  %v112 = vld [vmem:[%s0 + $0x2e0] sm:$0xff]
  %v113 = vld [vmem:[%s0 + $0x2e8] sm:$0xff]
  %v114 = vld [vmem:[%s0 + $0x2f0] sm:$0xff]
  %v115 = vld [vmem:[%s0 + $0x2f8] sm:$0xff]
  %v116 = vld [vmem:[%s0 + $0x300] sm:$0xff]
  %v117 = vld [vmem:[%s0 + $0x308] sm:$0xff]
  %v118 = vld [vmem:[%s0 + $0x310] sm:$0xff]
  %v119 = vld [vmem:[%s0 + $0x318] sm:$0xff]
  %v120 = vld [vmem:[%s0 + $0x320] sm:$0xff]
  %v121 = vld [vmem:[%s0 + $0x328] sm:$0xff]
  %v122 = vld [vmem:[%s0 + $0x330] sm:$0xff]
  %v123 = vld [vmem:[%s0 + $0x338] sm:$0xff]
  %v124 = vld [vmem:[%s0 + $0x340] sm:$0xff]
  %v125 = vld [vmem:[%s0 + $0x348] sm:$0xff]
  %v126 = vld [vmem:[%s0 + $0x350] sm:$0xff]
  %v127 = vld [vmem:[%s0 + $0x358] sm:$0xff]
  %v128 = vld [vmem:[%s0 + $0x360] sm:$0xff]
  %v129 = vld [vmem:[%s0 + $0x368] sm:$0xff]
  %v130 = vld [vmem:[%s0 + $0x370] sm:$0xff]
  %v131 = vld [vmem:[%s0 + $0x378] sm:$0xff]
  %v132 = vld [vmem:[%s0 + $0x380] sm:$0xff]
  %v133 = vld [vmem:[%s0 + $0x388] sm:$0xff]
  %v134 = vld [vmem:[%s0 + $0x390] sm:$0xff]
  %v135 = vld [vmem:[%s0 + $0x398] sm:$0xff]
  %v136 = vld [vmem:[%s0 + $0x3a0] sm:$0xff]
  %v137 = vld [vmem:[%s0 + $0x3a8] sm:$0xff]
  %v138 = vld [vmem:[%s0 + $0x3b0] sm:$0xff]
  %v139 = vld [vmem:[%s0 + $0x3b8] sm:$0xff]
  %v140 = vld [vmem:[%s0 + $0x3c0] sm:$0xff]
  %v141 = vld [vmem:[%s0 + $0x3c8] sm:$0xff]
  %v142 = vld [vmem:[%s0 + $0x3d0] sm:$0xff]
  %v143 = vld [vmem:[%s0 + $0x3d8] sm:$0xff]
  %v144 = vld [vmem:[%s0 + $0x3e0] sm:$0xff]
  %v145 = vld [vmem:[%s0 + $0x3e8] sm:$0xff]
  %v146 = vld [vmem:[%s0 + $0x3f0] sm:$0xff]
  %v147 = vld [vmem:[%s0 + $0x3f8] sm:$0xff]
  %v148 = vld [vmem:[%s1] sm:$0xff]
  %v149 = vld [vmem:[%s1 + $0x8] sm:$0xff]
  %v150 = vld [vmem:[%s1 + $0x10] sm:$0xff]
  %v151 = vld [vmem:[%s1 + $0x18] sm:$0xff]
  %v152 = vld [vmem:[%s1 + $0x20] sm:$0xff]
  %v153 = vld [vmem:[%s1 + $0x28] sm:$0xff]
  %v154 = vld [vmem:[%s1 + $0x30] sm:$0xff]
  %v155 = vld [vmem:[%s1 + $0x38] sm:$0xff]
  %v156 = vld [vmem:[%s1 + $0x40] sm:$0xff]
  %v157 = vld [vmem:[%s1 + $0x48] sm:$0xff]
  %v158 = vld [vmem:[%s1 + $0x50] sm:$0xff]
  %v159 = vld [vmem:[%s1 + $0x58] sm:$0xff]
  %v160 = vld [vmem:[%s1 + $0x60] sm:$0xff]
  %v161 = vld [vmem:[%s1 + $0x68] sm:$0xff]
  %v162 = vld [vmem:[%s1 + $0x70] sm:$0xff]
  %v163 = vld [vmem:[%s1 + $0x78] sm:$0xff]
  %v164 = vld [vmem:[%s1 + $0x80] sm:$0xff]
  %v165 = vld [vmem:[%s1 + $0x88] sm:$0xff]
  %v166 = vld [vmem:[%s1 + $0x90] sm:$0x7]
  %vm167 = vcmask 154624
  %v169 = vsel %vm167, %v21, 0
  %v172 = vsel %vm167, %v23, 0
  %v175 = vsel %vm167, %v25, 0
  %v178 = vsel %vm167, %v27, 0
  %v181 = vsel %vm167, %v29, 0
  %v184 = vsel %vm167, %v31, 0
  %v187 = vsel %vm167, %v33, 0
  %v190 = vsel %vm167, %v35, 0
  %v193 = vsel %vm167, %v37, 0
  %v196 = vsel %vm167, %v39, 0
  %v199 = vsel %vm167, %v41, 0
  %v202 = vsel %vm167, %v43, 0
  %v205 = vsel %vm167, %v45, 0
  %v208 = vsel %vm167, %v47, 0
  %v211 = vsel %vm167, %v49, 0
  %v214 = vsel %vm167, %v51, 0
  %v217 = vsel %vm167, %v53, 0
  %v220 = vsel %vm167, %v55, 0
  %v223 = vsel %vm167, %v57, 0
  %v226 = vsel %vm167, %v59, 0
  %v229 = vsel %vm167, %v61, 0
  %v232 = vsel %vm167, %v63, 0
  %v235 = vsel %vm167, %v65, 0
  %v238 = vsel %vm167, %v67, 0
  %v241 = vsel %vm167, %v69, 0
  %v244 = vsel %vm167, %v71, 0
  %v247 = vsel %vm167, %v73, 0
  %v250 = vsel %vm167, %v75, 0
  %v253 = vsel %vm167, %v77, 0
  %v256 = vsel %vm167, %v79, 0
  %v259 = vsel %vm167, %v81, 0
  %v262 = vsel %vm167, %v83, 0
  %v265 = vsel %vm167, %v85, 0
  %v268 = vsel %vm167, %v87, 0
  %v271 = vsel %vm167, %v89, 0
  %v274 = vsel %vm167, %v91, 0
  %v277 = vsel %vm167, %v93, 0
  %v280 = vsel %vm167, %v95, 0
  %v283 = vsel %vm167, %v97, 0
  %v286 = vsel %vm167, %v99, 0
  %v289 = vsel %vm167, %v101, 0
  %v292 = vsel %vm167, %v103, 0
  %v295 = vsel %vm167, %v105, 0
  %v298 = vsel %vm167, %v107, 0
  %v301 = vsel %vm167, %v109, 0
  %v304 = vsel %vm167, %v111, 0
  %v307 = vsel %vm167, %v113, 0
  %v310 = vsel %vm167, %v115, 0
  %v313 = vsel %vm167, %v117, 0
  %v316 = vsel %vm167, %v119, 0
  %v319 = vsel %vm167, %v121, 0
  %v322 = vsel %vm167, %v123, 0
  %v325 = vsel %vm167, %v125, 0
  %v328 = vsel %vm167, %v127, 0
  %v331 = vsel %vm167, %v129, 0
  %v334 = vsel %vm167, %v131, 0
  %v337 = vsel %vm167, %v133, 0
  %v340 = vsel %vm167, %v135, 0
  %v343 = vsel %vm167, %v137, 0
  %v346 = vsel %vm167, %v139, 0
  %v349 = vsel %vm167, %v141, 0
  %v352 = vsel %vm167, %v143, 0
  %v355 = vsel %vm167, %v145, 0
  %v358 = vsel %vm167, %v147, 0
  %vm360 = vcmask 1042432
  %v362 = vsel %vm360, %v166, 0
  %364 = vmatprep.subr.mxu0 0.0
  %365 = vmatpush1.msra.mxu0 %v148
  %366 = vmatprep.subr.mxu0 0.0
  %367 = vmatpush1.msra.mxu0 %v149
  %368 = vmatprep.subr.mxu0 0.0
  %369 = vmatpush1.msra.mxu0 %v150
  %370 = vmatprep.subr.mxu0 0.0
  %371 = vmatpush1.msra.mxu0 %v151
  %372 = vmatprep.subr.mxu0 0.0
  %373 = vmatpush1.msra.mxu0 %v152
  %374 = vmatprep.subr.mxu0 0.0
  %375 = vmatpush1.msra.mxu0 %v153
  %376 = vmatprep.subr.mxu0 0.0
  %377 = vmatpush1.msra.mxu0 %v154
  %378 = vmatprep.subr.mxu0 0.0
  %379 = vmatpush1.msra.mxu0 %v155
  %380 = vmatprep.subr.mxu0 0.0
  %381 = vmatpush1.msra.mxu0 %v156
  %382 = vmatprep.subr.mxu0 0.0
  %383 = vmatpush1.msra.mxu0 %v157
  %384 = vmatprep.subr.mxu0 0.0
  %385 = vmatpush1.msra.mxu0 %v158
  %386 = vmatprep.subr.mxu0 0.0
  %387 = vmatpush1.msra.mxu0 %v159
  %388 = vmatprep.subr.mxu0 0.0
  %389 = vmatpush1.msra.mxu0 %v160
  %390 = vmatprep.subr.mxu0 0.0
  %391 = vmatpush1.msra.mxu0 %v161
  %392 = vmatprep.subr.mxu0 0.0
  %393 = vmatpush1.msra.mxu0 %v162
  %394 = vmatprep.subr.mxu0 0.0
  %395 = vmatpush1.msra.mxu0 %v163
  %396 = vmatprep.subr.mxu0 0.0
  %397 = vmatpush1.msra.mxu0 %v164
  %398 = vmatprep.subr.mxu0 0.0
  %399 = vmatpush1.msra.mxu0 %v165
  %400 = vmatprep.subr.mxu0 0.0
  %401 = vmatpush1.msra.mxu0 %v362
  %402 = vmatprep.subr.mxu0 0.0
  %403 = vmatpush1.msra.mxu0 0.0
  %404 = vmatprep.subr.mxu0 0.0
  %405 = vmatpush1.msra.mxu0 0.0
  %406 = vmatprep.subr.mxu0 0.0
  %407 = vmatpush1.msra.mxu0 0.0
  %408 = vmatprep.subr.mxu0 0.0
  %409 = vmatpush1.msra.mxu0 0.0
  %410 = vmatprep.subr.mxu0 0.0
  %411 = vmatpush1.msra.mxu0 0.0
  %412 = vmatprep.subr.mxu0 0.0
  %413 = vmatpush1.msra.mxu0 0.0
  %414 = vmatprep.subr.mxu0 0.0
  %415 = vmatpush1.msra.mxu0 0.0
  %416 = vmatprep.subr.mxu0 0.0
  %417 = vmatpush1.msra.mxu0 0.0
  %418 = vmatprep.subr.mxu0 0.0
  %419 = vmatpush1.msra.mxu0 0.0
  %420 = vmatprep.subr.mxu0 0.0
  %421 = vmatpush1.msra.mxu0 0.0
  %422 = vmatprep.subr.mxu0 0.0
  %423 = vmatpush1.msra.mxu0 0.0
  %424 = vmatprep.subr.mxu0 0.0
  %425 = vmatpush1.msra.mxu0 0.0
  %426 = vmatprep.subr.mxu0 0.0
  %427 = vmatpush1.msra.mxu0 0.0
  %428 = vmatprep.mubr.f32.mxu0 %v169
  %429 = vmatmul.mubr.f32.gmra.mrb[0].mxu0 %v20
  %v430 = vpop.f32.mrb[0].mxu0
  %v431 = vadd.f32 0.0, %v430
  %v432 = vpop.f32.mrb[0].mxu0
  %433 = vmatprep.mubr.f32.mxu0 %v172
  %434 = vmatmul.mubr.f32.gmra.mrb[0].mxu0 %v22
  %v435 = vpop.f32.mrb[0].mxu0
  %v436 = vadd.f32 0.0, %v435
  %v437 = vpop.f32.mrb[0].mxu0
  %438 = vmatprep.mubr.f32.mxu0 %v175
  %439 = vmatmul.mubr.f32.gmra.mrb[0].mxu0 %v24
  %v440 = vpop.f32.mrb[0].mxu0
  %v441 = vadd.f32 0.0, %v440
  %v442 = vpop.f32.mrb[0].mxu0
  %443 = vmatprep.mubr.f32.mxu0 %v178
  %444 = vmatmul.mubr.f32.gmra.mrb[0].mxu0 %v26
  %v445 = vpop.f32.mrb[0].mxu0
  %v446 = vadd.f32 0.0, %v445
  %v447 = vpop.f32.mrb[0].mxu0
  %448 = vmatprep.mubr.f32.mxu0 %v181
  %449 = vmatmul.mubr.f32.gmra.mrb[0].mxu0 %v28
  %v450 = vpop.f32.mrb[0].mxu0
  %v451 = vadd.f32 0.0, %v450
  %v452 = vpop.f32.mrb[0].mxu0
  %453 = vmatprep.mubr.f32.mxu0 %v184
  %454 = vmatmul.mubr.f32.gmra.mrb[0].mxu0 %v30
  %v455 = vpop.f32.mrb[0].mxu0
  %v456 = vadd.f32 0.0, %v455
  %v457 = vpop.f32.mrb[0].mxu0
  %458 = vmatprep.mubr.f32.mxu0 %v187
  %459 = vmatmul.mubr.f32.gmra.mrb[0].mxu0 %v32
  %v460 = vpop.f32.mrb[0].mxu0
  %v461 = vadd.f32 0.0, %v460
  %v462 = vpop.f32.mrb[0].mxu0
  %463 = vmatprep.mubr.f32.mxu0 %v190
  %464 = vmatmul.mubr.f32.gmra.mrb[0].mxu0 %v34
  %v465 = vpop.f32.mrb[0].mxu0
  %v466 = vadd.f32 0.0, %v465
  %v467 = vpop.f32.mrb[0].mxu0
  %468 = vmatprep.mubr.f32.mxu0 %v193
  %469 = vmatmul.mubr.f32.gmra.mrb[0].mxu0 %v36
  %v470 = vpop.f32.mrb[0].mxu0
  %v471 = vadd.f32 0.0, %v470
  %v472 = vpop.f32.mrb[0].mxu0
  %473 = vmatprep.mubr.f32.mxu0 %v196
  %474 = vmatmul.mubr.f32.gmra.mrb[0].mxu0 %v38
  %v475 = vpop.f32.mrb[0].mxu0
  %v476 = vadd.f32 0.0, %v475
  %v477 = vpop.f32.mrb[0].mxu0
  %478 = vmatprep.mubr.f32.mxu0 %v199
  %479 = vmatmul.mubr.f32.gmra.mrb[0].mxu0 %v40
  %v480 = vpop.f32.mrb[0].mxu0
  %v481 = vadd.f32 0.0, %v480
  %v482 = vpop.f32.mrb[0].mxu0
  %483 = vmatprep.mubr.f32.mxu0 %v202
  %484 = vmatmul.mubr.f32.gmra.mrb[0].mxu0 %v42
  %v485 = vpop.f32.mrb[0].mxu0
  %v486 = vadd.f32 0.0, %v485
  %v487 = vpop.f32.mrb[0].mxu0
  %488 = vmatprep.mubr.f32.mxu0 %v205
  %489 = vmatmul.mubr.f32.gmra.mrb[0].mxu0 %v44
  %v490 = vpop.f32.mrb[0].mxu0
  %v491 = vadd.f32 0.0, %v490
  %v492 = vpop.f32.mrb[0].mxu0
  %493 = vmatprep.mubr.f32.mxu0 %v208
  %494 = vmatmul.mubr.f32.gmra.mrb[0].mxu0 %v46
  %v495 = vpop.f32.mrb[0].mxu0
  %v496 = vadd.f32 0.0, %v495
  %v497 = vpop.f32.mrb[0].mxu0
  %498 = vmatprep.mubr.f32.mxu0 %v211
  %499 = vmatmul.mubr.f32.gmra.mrb[0].mxu0 %v48
  %v500 = vpop.f32.mrb[0].mxu0
  %v501 = vadd.f32 0.0, %v500
  %v502 = vpop.f32.mrb[0].mxu0
  %503 = vmatprep.mubr.f32.mxu0 %v214
  %504 = vmatmul.mubr.f32.gmra.mrb[0].mxu0 %v50
  %v505 = vpop.f32.mrb[0].mxu0
  %v506 = vadd.f32 0.0, %v505
  %v507 = vpop.f32.mrb[0].mxu0
  %508 = vmatprep.mubr.f32.mxu0 %v217
  %509 = vmatmul.mubr.f32.gmra.mrb[0].mxu0 %v52
  %v510 = vpop.f32.mrb[0].mxu0
  %v511 = vadd.f32 0.0, %v510
  %v512 = vpop.f32.mrb[0].mxu0
  %513 = vmatprep.mubr.f32.mxu0 %v220
  %514 = vmatmul.mubr.f32.gmra.mrb[0].mxu0 %v54
  %v515 = vpop.f32.mrb[0].mxu0
  %v516 = vadd.f32 0.0, %v515
  %v517 = vpop.f32.mrb[0].mxu0
  %518 = vmatprep.mubr.f32.mxu0 %v223
  %519 = vmatmul.mubr.f32.gmra.mrb[0].mxu0 %v56
  %v520 = vpop.f32.mrb[0].mxu0
  %v521 = vadd.f32 0.0, %v520
  %v522 = vpop.f32.mrb[0].mxu0
  %523 = vmatprep.mubr.f32.mxu0 %v226
  %524 = vmatmul.mubr.f32.gmra.mrb[0].mxu0 %v58
  %v525 = vpop.f32.mrb[0].mxu0
  %v526 = vadd.f32 0.0, %v525
  %v527 = vpop.f32.mrb[0].mxu0
  %528 = vmatprep.mubr.f32.mxu0 %v229
  %529 = vmatmul.mubr.f32.gmra.mrb[0].mxu0 %v60
  %v530 = vpop.f32.mrb[0].mxu0
  %v531 = vadd.f32 0.0, %v530
  %v532 = vpop.f32.mrb[0].mxu0
  %533 = vmatprep.mubr.f32.mxu0 %v232
  %534 = vmatmul.mubr.f32.gmra.mrb[0].mxu0 %v62
  %v535 = vpop.f32.mrb[0].mxu0
  %v536 = vadd.f32 0.0, %v535
  %v537 = vpop.f32.mrb[0].mxu0
  %538 = vmatprep.mubr.f32.mxu0 %v235
  %539 = vmatmul.mubr.f32.gmra.mrb[0].mxu0 %v64
  %v540 = vpop.f32.mrb[0].mxu0
  %v541 = vadd.f32 0.0, %v540
  %v542 = vpop.f32.mrb[0].mxu0
  %543 = vmatprep.mubr.f32.mxu0 %v238
  %544 = vmatmul.mubr.f32.gmra.mrb[0].mxu0 %v66
  %v545 = vpop.f32.mrb[0].mxu0
  %v546 = vadd.f32 0.0, %v545
  %v547 = vpop.f32.mrb[0].mxu0
  %548 = vmatprep.mubr.f32.mxu0 %v241
  %549 = vmatmul.mubr.f32.gmra.mrb[0].mxu0 %v68
  %v550 = vpop.f32.mrb[0].mxu0
  %v551 = vadd.f32 0.0, %v550
  %v552 = vpop.f32.mrb[0].mxu0
  %553 = vmatprep.mubr.f32.mxu0 %v244
  %554 = vmatmul.mubr.f32.gmra.mrb[0].mxu0 %v70
  %v555 = vpop.f32.mrb[0].mxu0
  %v556 = vadd.f32 0.0, %v555
  %v557 = vpop.f32.mrb[0].mxu0
  %558 = vmatprep.mubr.f32.mxu0 %v247
  %559 = vmatmul.mubr.f32.gmra.mrb[0].mxu0 %v72
  %v560 = vpop.f32.mrb[0].mxu0
  %v561 = vadd.f32 0.0, %v560
  %v562 = vpop.f32.mrb[0].mxu0
  %563 = vmatprep.mubr.f32.mxu0 %v250
  %564 = vmatmul.mubr.f32.gmra.mrb[0].mxu0 %v74
  %v565 = vpop.f32.mrb[0].mxu0
  %v566 = vadd.f32 0.0, %v565
  %v567 = vpop.f32.mrb[0].mxu0
  %568 = vmatprep.mubr.f32.mxu0 %v253
  %569 = vmatmul.mubr.f32.gmra.mrb[0].mxu0 %v76
  %v570 = vpop.f32.mrb[0].mxu0
  %v571 = vadd.f32 0.0, %v570
  %v572 = vpop.f32.mrb[0].mxu0
  %573 = vmatprep.mubr.f32.mxu0 %v256
  %574 = vmatmul.mubr.f32.gmra.mrb[0].mxu0 %v78
  %v575 = vpop.f32.mrb[0].mxu0
  %v576 = vadd.f32 0.0, %v575
  %v577 = vpop.f32.mrb[0].mxu0
  %578 = vmatprep.mubr.f32.mxu0 %v259
  %579 = vmatmul.mubr.f32.gmra.mrb[0].mxu0 %v80
  %v580 = vpop.f32.mrb[0].mxu0
  %v581 = vpop.f32.mrb[0].mxu0
  %582 = vmatprep.mubr.f32.mxu0 %v262
  %583 = vmatmul.mubr.f32.gmra.mrb[0].mxu0 %v82
  %v584 = vpop.f32.mrb[0].mxu0
  %v585 = vpop.f32.mrb[0].mxu0
  %586 = vmatprep.mubr.f32.mxu0 %v265
  %587 = vmatmul.mubr.f32.gmra.mrb[0].mxu0 %v84
  %v588 = vpop.f32.mrb[0].mxu0
  %v589 = vadd.f32 0.0, %v588
  %v590 = vpop.f32.mrb[0].mxu0
  %591 = vmatprep.mubr.f32.mxu0 %v268
  %592 = vmatmul.mubr.f32.gmra.mrb[0].mxu0 %v86
  %v593 = vpop.f32.mrb[0].mxu0
  %v594 = vadd.f32 0.0, %v593
  %v595 = vpop.f32.mrb[0].mxu0
  %596 = vmatprep.mubr.f32.mxu0 %v271
  %597 = vmatmul.mubr.f32.gmra.mrb[0].mxu0 %v88
  %v598 = vpop.f32.mrb[0].mxu0
  %v599 = vadd.f32 0.0, %v598
  %v600 = vpop.f32.mrb[0].mxu0
  %601 = vmatprep.mubr.f32.mxu0 %v274
  %602 = vmatmul.mubr.f32.gmra.mrb[0].mxu0 %v90
  %v603 = vpop.f32.mrb[0].mxu0
  %v604 = vadd.f32 0.0, %v603
  %v605 = vpop.f32.mrb[0].mxu0
  %606 = vmatprep.mubr.f32.mxu0 %v277
  %607 = vmatmul.mubr.f32.gmra.mrb[0].mxu0 %v92
  %v608 = vpop.f32.mrb[0].mxu0
  %v609 = vadd.f32 0.0, %v608
  %v610 = vpop.f32.mrb[0].mxu0
  %611 = vmatprep.mubr.f32.mxu0 %v280
  %612 = vmatmul.mubr.f32.gmra.mrb[0].mxu0 %v94
  %v613 = vpop.f32.mrb[0].mxu0
  %v614 = vadd.f32 0.0, %v613
  %v615 = vpop.f32.mrb[0].mxu0
  %616 = vmatprep.mubr.f32.mxu0 %v283
  %617 = vmatmul.mubr.f32.gmra.mrb[0].mxu0 %v96
  %v618 = vpop.f32.mrb[0].mxu0
  %v619 = vadd.f32 0.0, %v618
  %v620 = vpop.f32.mrb[0].mxu0
  %621 = vmatprep.mubr.f32.mxu0 %v286
  %622 = vmatmul.mubr.f32.gmra.mrb[0].mxu0 %v98
  %v623 = vpop.f32.mrb[0].mxu0
  %v624 = vadd.f32 0.0, %v623
  %v625 = vpop.f32.mrb[0].mxu0
  %626 = vmatprep.mubr.f32.mxu0 %v289
  %627 = vmatmul.mubr.f32.gmra.mrb[0].mxu0 %v100
  %v628 = vpop.f32.mrb[0].mxu0
  %v629 = vadd.f32 0.0, %v628
  %v630 = vpop.f32.mrb[0].mxu0
  %631 = vmatprep.mubr.f32.mxu0 %v292
  %632 = vmatmul.mubr.f32.gmra.mrb[0].mxu0 %v102
  %v633 = vpop.f32.mrb[0].mxu0
  %v634 = vadd.f32 0.0, %v633
  %v635 = vpop.f32.mrb[0].mxu0
  %636 = vmatprep.mubr.f32.mxu0 %v295
  %637 = vmatmul.mubr.f32.gmra.mrb[0].mxu0 %v104
  %v638 = vpop.f32.mrb[0].mxu0
  %v639 = vadd.f32 0.0, %v638
  %v640 = vpop.f32.mrb[0].mxu0
  %641 = vmatprep.mubr.f32.mxu0 %v298
  %642 = vmatmul.mubr.f32.gmra.mrb[0].mxu0 %v106
  %v643 = vpop.f32.mrb[0].mxu0
  %v644 = vadd.f32 0.0, %v643
  %v645 = vpop.f32.mrb[0].mxu0
  %646 = vmatprep.mubr.f32.mxu0 %v301
  %647 = vmatmul.mubr.f32.gmra.mrb[0].mxu0 %v108
  %v648 = vpop.f32.mrb[0].mxu0
  %v649 = vadd.f32 0.0, %v648
  %v650 = vpop.f32.mrb[0].mxu0
  %651 = vmatprep.mubr.f32.mxu0 %v304
  %652 = vmatmul.mubr.f32.gmra.mrb[0].mxu0 %v110
  %v653 = vpop.f32.mrb[0].mxu0
  %v654 = vadd.f32 0.0, %v653
  %v655 = vpop.f32.mrb[0].mxu0
  %656 = vmatprep.mubr.f32.mxu0 %v307
  %657 = vmatmul.mubr.f32.gmra.mrb[0].mxu0 %v112
  %v658 = vpop.f32.mrb[0].mxu0
  %v659 = vadd.f32 0.0, %v658
  %v660 = vpop.f32.mrb[0].mxu0
  %661 = vmatprep.mubr.f32.mxu0 %v310
  %662 = vmatmul.mubr.f32.gmra.mrb[0].mxu0 %v114
  %v663 = vpop.f32.mrb[0].mxu0
  %v664 = vadd.f32 0.0, %v663
  %v665 = vpop.f32.mrb[0].mxu0
  %666 = vmatprep.mubr.f32.mxu0 %v313
  %667 = vmatmul.mubr.f32.gmra.mrb[0].mxu0 %v116
  %v668 = vpop.f32.mrb[0].mxu0
  %v669 = vadd.f32 0.0, %v668
  %v670 = vpop.f32.mrb[0].mxu0
  %671 = vmatprep.mubr.f32.mxu0 %v316
  %672 = vmatmul.mubr.f32.gmra.mrb[0].mxu0 %v118
  %v673 = vpop.f32.mrb[0].mxu0
  %v674 = vadd.f32 0.0, %v673
  %v675 = vpop.f32.mrb[0].mxu0
  %676 = vmatprep.mubr.f32.mxu0 %v319
  %677 = vmatmul.mubr.f32.gmra.mrb[0].mxu0 %v120
  %v678 = vpop.f32.mrb[0].mxu0
  %v679 = vadd.f32 0.0, %v678
  %v680 = vpop.f32.mrb[0].mxu0
  %681 = vmatprep.mubr.f32.mxu0 %v322
  %682 = vmatmul.mubr.f32.gmra.mrb[0].mxu0 %v122
  %v683 = vpop.f32.mrb[0].mxu0
  %v684 = vadd.f32 0.0, %v683
  %v685 = vpop.f32.mrb[0].mxu0
  %686 = vmatprep.mubr.f32.mxu0 %v325
  %687 = vmatmul.mubr.f32.gmra.mrb[0].mxu0 %v124
  %v688 = vpop.f32.mrb[0].mxu0
  %v689 = vadd.f32 0.0, %v688
  %v690 = vpop.f32.mrb[0].mxu0
  %691 = vmatprep.mubr.f32.mxu0 %v328
  %692 = vmatmul.mubr.f32.gmra.mrb[0].mxu0 %v126
  %v693 = vpop.f32.mrb[0].mxu0
  %v694 = vadd.f32 0.0, %v693
  %v695 = vpop.f32.mrb[0].mxu0
  %696 = vmatprep.mubr.f32.mxu0 %v331
  %697 = vmatmul.mubr.f32.gmra.mrb[0].mxu0 %v128
  %v698 = vpop.f32.mrb[0].mxu0
  %v699 = vadd.f32 0.0, %v698
  %v700 = vpop.f32.mrb[0].mxu0
  %701 = vmatprep.mubr.f32.mxu0 %v334
  %702 = vmatmul.mubr.f32.gmra.mrb[0].mxu0 %v130
  %v703 = vpop.f32.mrb[0].mxu0
  %v704 = vadd.f32 0.0, %v703
  %v705 = vpop.f32.mrb[0].mxu0
  %706 = vmatprep.mubr.f32.mxu0 %v337
  %707 = vmatmul.mubr.f32.gmra.mrb[0].mxu0 %v132
  %v708 = vpop.f32.mrb[0].mxu0
  %v709 = vadd.f32 0.0, %v708
  %v710 = vpop.f32.mrb[0].mxu0
  %711 = vmatprep.mubr.f32.mxu0 %v340
  %712 = vmatmul.mubr.f32.gmra.mrb[0].mxu0 %v134
  %v713 = vpop.f32.mrb[0].mxu0
  %v714 = vadd.f32 0.0, %v713
  %v715 = vpop.f32.mrb[0].mxu0
  %716 = vmatprep.mubr.f32.mxu0 %v343
  %717 = vmatmul.mubr.f32.gmra.mrb[0].mxu0 %v136
  %v718 = vpop.f32.mrb[0].mxu0
  %v719 = vadd.f32 0.0, %v718
  %v720 = vpop.f32.mrb[0].mxu0
  %721 = vmatprep.mubr.f32.mxu0 %v346
  %722 = vmatmul.mubr.f32.gmra.mrb[0].mxu0 %v138
  %v723 = vpop.f32.mrb[0].mxu0
  %v724 = vadd.f32 0.0, %v723
  %v725 = vpop.f32.mrb[0].mxu0
  %726 = vmatprep.mubr.f32.mxu0 %v349
  %727 = vmatmul.mubr.f32.gmra.mrb[0].mxu0 %v140
  %v728 = vpop.f32.mrb[0].mxu0
  %v729 = vadd.f32 0.0, %v728
  %v730 = vpop.f32.mrb[0].mxu0
  %731 = vmatprep.mubr.f32.mxu0 %v352
  %732 = vmatmul.mubr.f32.gmra.mrb[0].mxu0 %v142
  %v733 = vpop.f32.mrb[0].mxu0
  %v734 = vadd.f32 0.0, %v733
  %v735 = vpop.f32.mrb[0].mxu0
  %736 = vmatprep.mubr.f32.mxu0 %v355
  %737 = vmatmul.mubr.f32.gmra.mrb[0].mxu0 %v144
  %v738 = vpop.f32.mrb[0].mxu0
  %v739 = vpop.f32.mrb[0].mxu0
  %740 = vmatprep.mubr.f32.mxu0 %v358
  %741 = vmatmul.mubr.f32.gmra.mrb[0].mxu0 %v146
  %v742 = vpop.f32.mrb[0].mxu0
  %v743 = vpop.f32.mrb[0].mxu0
  %744 = vdwg.mxu0
  %v745 = vld [vmem:[%s2] sm:$0x1]
  %v747 = vlaneseq
  %v748 = vshrl.u32 %v747, 7
  %v749 = vsub.s32 0, %v748
  %v750 = vrot.slane %v745, %v749
  %v752 = vmul.f32 %v431, %v750
  %v753 = vmul.f32 %v436, %v750
  %v754 = vmul.f32 %v441, %v750
  %v755 = vmul.f32 %v446, %v750
  %v756 = vmul.f32 %v451, %v750
  %v757 = vmul.f32 %v456, %v750
  %v758 = vmul.f32 %v461, %v750
  %v759 = vmul.f32 %v466, %v750
  %v760 = vmul.f32 %v471, %v750
  %v761 = vmul.f32 %v476, %v750
  %v762 = vmul.f32 %v481, %v750
  %v763 = vmul.f32 %v486, %v750
  %v764 = vmul.f32 %v491, %v750
  %v765 = vmul.f32 %v496, %v750
  %v766 = vmul.f32 %v501, %v750
  %v767 = vmul.f32 %v506, %v750
  %v768 = vmul.f32 %v511, %v750
  %v769 = vmul.f32 %v516, %v750
  %v770 = vmul.f32 %v521, %v750
  %v771 = vmul.f32 %v526, %v750
  %v772 = vmul.f32 %v531, %v750
  %v773 = vmul.f32 %v536, %v750
  %v774 = vmul.f32 %v541, %v750
  %v775 = vmul.f32 %v546, %v750
  %v776 = vmul.f32 %v551, %v750
  %v777 = vmul.f32 %v556, %v750
  %v778 = vmul.f32 %v561, %v750
  %v779 = vmul.f32 %v566, %v750
  %v780 = vmul.f32 %v571, %v750
  %v781 = vmul.f32 %v576, %v750
  %v782 = vmul.f32 %v589, %v750
  %v783 = vmul.f32 %v594, %v750
  %v784 = vmul.f32 %v599, %v750
  %v785 = vmul.f32 %v604, %v750
  %v786 = vmul.f32 %v609, %v750
  %v787 = vmul.f32 %v614, %v750
  %v788 = vmul.f32 %v619, %v750
  %v789 = vmul.f32 %v624, %v750
  %v790 = vmul.f32 %v629, %v750
  %v791 = vmul.f32 %v634, %v750
  %v792 = vmul.f32 %v639, %v750
  %v793 = vmul.f32 %v644, %v750
  %v794 = vmul.f32 %v649, %v750
  %v795 = vmul.f32 %v654, %v750
  %v796 = vmul.f32 %v659, %v750
  %v797 = vmul.f32 %v664, %v750
  %v798 = vmul.f32 %v669, %v750
  %v799 = vmul.f32 %v674, %v750
  %v800 = vmul.f32 %v679, %v750
  %v801 = vmul.f32 %v684, %v750
  %v802 = vmul.f32 %v689, %v750
  %v803 = vmul.f32 %v694, %v750
  %v804 = vmul.f32 %v699, %v750
  %v805 = vmul.f32 %v704, %v750
  %v806 = vmul.f32 %v709, %v750
  %v807 = vmul.f32 %v714, %v750
  %v808 = vmul.f32 %v719, %v750
  %v809 = vmul.f32 %v724, %v750
  %v810 = vmul.f32 %v729, %v750
  %v811 = vmul.f32 %v734, %v750
  %v812 = vld [vmem:[%s3] sm:$0x1]
  %v814 = vlaneseq
  %v815 = vshrl.u32 %v814, 7
  %v816 = vsub.s32 0, %v815
  %v817 = vrot.slane %v812, %v816
  %v819 = vadd.f32 %v752, %v817
  %v820 = vadd.f32 %v753, %v817
  %v821 = vadd.f32 %v754, %v817
  %v822 = vadd.f32 %v755, %v817
  %v823 = vadd.f32 %v756, %v817
  %v824 = vadd.f32 %v757, %v817
  %v825 = vadd.f32 %v758, %v817
  %v826 = vadd.f32 %v759, %v817
  %v827 = vadd.f32 %v760, %v817
  %v828 = vadd.f32 %v761, %v817
  %v829 = vadd.f32 %v762, %v817
  %v830 = vadd.f32 %v763, %v817
  %v831 = vadd.f32 %v764, %v817
  %v832 = vadd.f32 %v765, %v817
  %v833 = vadd.f32 %v766, %v817
  %v834 = vadd.f32 %v767, %v817
  %v835 = vadd.f32 %v768, %v817
  %v836 = vadd.f32 %v769, %v817
  %v837 = vadd.f32 %v770, %v817
  %v838 = vadd.f32 %v771, %v817
  %v839 = vadd.f32 %v772, %v817
  %v840 = vadd.f32 %v773, %v817
  %v841 = vadd.f32 %v774, %v817
  %v842 = vadd.f32 %v775, %v817
  %v843 = vadd.f32 %v776, %v817
  %v844 = vadd.f32 %v777, %v817
  %v845 = vadd.f32 %v778, %v817
  %v846 = vadd.f32 %v779, %v817
  %v847 = vadd.f32 %v780, %v817
  %v848 = vadd.f32 %v781, %v817
  %v849 = vadd.f32 %v782, %v817
  %v850 = vadd.f32 %v783, %v817
  %v851 = vadd.f32 %v784, %v817
  %v852 = vadd.f32 %v785, %v817
  %v853 = vadd.f32 %v786, %v817
  %v854 = vadd.f32 %v787, %v817
  %v855 = vadd.f32 %v788, %v817
  %v856 = vadd.f32 %v789, %v817
  %v857 = vadd.f32 %v790, %v817
  %v858 = vadd.f32 %v791, %v817
  %v859 = vadd.f32 %v792, %v817
  %v860 = vadd.f32 %v793, %v817
  %v861 = vadd.f32 %v794, %v817
  %v862 = vadd.f32 %v795, %v817
  %v863 = vadd.f32 %v796, %v817
  %v864 = vadd.f32 %v797, %v817
  %v865 = vadd.f32 %v798, %v817
  %v866 = vadd.f32 %v799, %v817
  %v867 = vadd.f32 %v800, %v817
  %v868 = vadd.f32 %v801, %v817
  %v869 = vadd.f32 %v802, %v817
  %v870 = vadd.f32 %v803, %v817
  %v871 = vadd.f32 %v804, %v817
  %v872 = vadd.f32 %v805, %v817
  %v873 = vadd.f32 %v806, %v817
  %v874 = vadd.f32 %v807, %v817
  %v875 = vadd.f32 %v808, %v817
  %v876 = vadd.f32 %v809, %v817
  %v877 = vadd.f32 %v810, %v817
  %v878 = vadd.f32 %v811, %v817
  %v879 = vmax.f32 %v819, 0.0
  %v880 = vmax.f32 %v820, 0.0
  %v881 = vmax.f32 %v821, 0.0
  %v882 = vmax.f32 %v822, 0.0
  %v883 = vmax.f32 %v823, 0.0
  %v884 = vmax.f32 %v824, 0.0
  %v885 = vmax.f32 %v825, 0.0
  %v886 = vmax.f32 %v826, 0.0
  %v887 = vmax.f32 %v827, 0.0
  %v888 = vmax.f32 %v828, 0.0
  %v889 = vmax.f32 %v829, 0.0
  %v890 = vmax.f32 %v830, 0.0
  %v891 = vmax.f32 %v831, 0.0
  %v892 = vmax.f32 %v832, 0.0
  %v893 = vmax.f32 %v833, 0.0
  %v894 = vmax.f32 %v834, 0.0
  %v895 = vmax.f32 %v835, 0.0
  %v896 = vmax.f32 %v836, 0.0
  %v897 = vmax.f32 %v837, 0.0
  %v898 = vmax.f32 %v838, 0.0
  %v899 = vmax.f32 %v839, 0.0
  %v900 = vmax.f32 %v840, 0.0
  %v901 = vmax.f32 %v841, 0.0
  %v902 = vmax.f32 %v842, 0.0
  %v903 = vmax.f32 %v843, 0.0
  %v904 = vmax.f32 %v844, 0.0
  %v905 = vmax.f32 %v845, 0.0
  %v906 = vmax.f32 %v846, 0.0
  %v907 = vmax.f32 %v847, 0.0
  %v908 = vmax.f32 %v848, 0.0
  %v909 = vmax.f32 %v849, 0.0
  %v910 = vmax.f32 %v850, 0.0
  %v911 = vmax.f32 %v851, 0.0
  %v912 = vmax.f32 %v852, 0.0
  %v913 = vmax.f32 %v853, 0.0
  %v914 = vmax.f32 %v854, 0.0
  %v915 = vmax.f32 %v855, 0.0
  %v916 = vmax.f32 %v856, 0.0
  %v917 = vmax.f32 %v857, 0.0
  %v918 = vmax.f32 %v858, 0.0
  %v919 = vmax.f32 %v859, 0.0
  %v920 = vmax.f32 %v860, 0.0
  %v921 = vmax.f32 %v861, 0.0
  %v922 = vmax.f32 %v862, 0.0
  %v923 = vmax.f32 %v863, 0.0
  %v924 = vmax.f32 %v864, 0.0
  %v925 = vmax.f32 %v865, 0.0
  %v926 = vmax.f32 %v866, 0.0
  %v927 = vmax.f32 %v867, 0.0
  %v928 = vmax.f32 %v868, 0.0
  %v929 = vmax.f32 %v869, 0.0
  %v930 = vmax.f32 %v870, 0.0
  %v931 = vmax.f32 %v871, 0.0
  %v932 = vmax.f32 %v872, 0.0
  %v933 = vmax.f32 %v873, 0.0
  %v934 = vmax.f32 %v874, 0.0
  %v935 = vmax.f32 %v875, 0.0
  %v936 = vmax.f32 %v876, 0.0
  %v937 = vmax.f32 %v877, 0.0
  %v938 = vmax.f32 %v878, 0.0
  %v939 = vld [vmem:[%s4] sm:$0xff]
  %v940 = vld [vmem:[%s4 + $0x8] sm:$0xff]
  %v941 = vld [vmem:[%s4 + $0x10] sm:$0xff]
  %v942 = vld [vmem:[%s4 + $0x18] sm:$0xff]
  %v943 = vld [vmem:[%s4 + $0x20] sm:$0xff]
  %v944 = vld [vmem:[%s4 + $0x28] sm:$0xff]
  %v945 = vld [vmem:[%s4 + $0x30] sm:$0xff]
  %v946 = vld [vmem:[%s4 + $0x38] sm:$0xff]
  %v947 = vld [vmem:[%s4 + $0x40] sm:$0xff]
  %v948 = vld [vmem:[%s4 + $0x48] sm:$0xff]
  %v949 = vld [vmem:[%s4 + $0x50] sm:$0xff]
  %v950 = vld [vmem:[%s4 + $0x58] sm:$0xff]
  %v951 = vld [vmem:[%s4 + $0x60] sm:$0xff]
  %v952 = vld [vmem:[%s4 + $0x68] sm:$0xff]
  %v953 = vld [vmem:[%s4 + $0x70] sm:$0xff]
  %v954 = vld [vmem:[%s4 + $0x78] sm:$0xff]
  %v955 = vld [vmem:[%s4 + $0x80] sm:$0xff]
  %v956 = vld [vmem:[%s4 + $0x88] sm:$0xff]
  %v957 = vld [vmem:[%s4 + $0x90] sm:$0xff]
  %v958 = vld [vmem:[%s4 + $0x98] sm:$0xff]
  %v959 = vld [vmem:[%s4 + $0xa0] sm:$0xff]
  %v960 = vld [vmem:[%s4 + $0xa8] sm:$0xff]
  %v961 = vld [vmem:[%s4 + $0xb0] sm:$0xff]
  %v962 = vld [vmem:[%s4 + $0xb8] sm:$0xff]
  %v963 = vld [vmem:[%s4 + $0xc0] sm:$0xff]
  %v964 = vld [vmem:[%s4 + $0xc8] sm:$0xff]
  %v965 = vld [vmem:[%s4 + $0xd0] sm:$0xff]
  %v966 = vld [vmem:[%s4 + $0xd8] sm:$0xff]
  %v967 = vld [vmem:[%s4 + $0xe0] sm:$0xff]
  %v968 = vld [vmem:[%s4 + $0xe8] sm:$0xff]
  %v969 = vld [vmem:[%s4 + $0x100] sm:$0xff]
  %v970 = vld [vmem:[%s4 + $0x108] sm:$0xff]
  %v971 = vld [vmem:[%s4 + $0x110] sm:$0xff]
  %v972 = vld [vmem:[%s4 + $0x118] sm:$0xff]
  %v973 = vld [vmem:[%s4 + $0x120] sm:$0xff]
  %v974 = vld [vmem:[%s4 + $0x128] sm:$0xff]
  %v975 = vld [vmem:[%s4 + $0x130] sm:$0xff]
  %v976 = vld [vmem:[%s4 + $0x138] sm:$0xff]
  %v977 = vld [vmem:[%s4 + $0x140] sm:$0xff]
  %v978 = vld [vmem:[%s4 + $0x148] sm:$0xff]
  %v979 = vld [vmem:[%s4 + $0x150] sm:$0xff]
  %v980 = vld [vmem:[%s4 + $0x158] sm:$0xff]
  %v981 = vld [vmem:[%s4 + $0x160] sm:$0xff]
  %v982 = vld [vmem:[%s4 + $0x168] sm:$0xff]
  %v983 = vld [vmem:[%s4 + $0x170] sm:$0xff]
  %v984 = vld [vmem:[%s4 + $0x178] sm:$0xff]
  %v985 = vld [vmem:[%s4 + $0x180] sm:$0xff]
  %v986 = vld [vmem:[%s4 + $0x188] sm:$0xff]
  %v987 = vld [vmem:[%s4 + $0x190] sm:$0xff]
  %v988 = vld [vmem:[%s4 + $0x198] sm:$0xff]
  %v989 = vld [vmem:[%s4 + $0x1a0] sm:$0xff]
  %v990 = vld [vmem:[%s4 + $0x1a8] sm:$0xff]
  %v991 = vld [vmem:[%s4 + $0x1b0] sm:$0xff]
  %v992 = vld [vmem:[%s4 + $0x1b8] sm:$0xff]
  %v993 = vld [vmem:[%s4 + $0x1c0] sm:$0xff]
  %v994 = vld [vmem:[%s4 + $0x1c8] sm:$0xff]
  %v995 = vld [vmem:[%s4 + $0x1d0] sm:$0xff]
  %v996 = vld [vmem:[%s4 + $0x1d8] sm:$0xff]
  %v997 = vld [vmem:[%s4 + $0x1e0] sm:$0xff]
  %v998 = vld [vmem:[%s4 + $0x1e8] sm:$0xff]
  %1000 = vset.pattern.permute.xlu0 0
  %1001 = vperm.xlu0 %1000, %v939
  %v1002 = vpop.permute.xlu0 %1001
  %1005 = vset.pattern.permute.xlu0 0
  %1006 = vperm.xlu0 %1005, %v940
  %v1007 = vpop.permute.xlu0 %1006
  %1010 = vset.pattern.permute.xlu0 0
  %1011 = vperm.xlu0 %1010, %v941
  %v1012 = vpop.permute.xlu0 %1011
  %1015 = vset.pattern.permute.xlu0 0
  %1016 = vperm.xlu0 %1015, %v942
  %v1017 = vpop.permute.xlu0 %1016
  %1020 = vset.pattern.permute.xlu0 0
  %1021 = vperm.xlu0 %1020, %v943
  %v1022 = vpop.permute.xlu0 %1021
  %1025 = vset.pattern.permute.xlu0 0
  %1026 = vperm.xlu0 %1025, %v944
  %v1027 = vpop.permute.xlu0 %1026
  %1030 = vset.pattern.permute.xlu0 0
  %1031 = vperm.xlu0 %1030, %v945
  %v1032 = vpop.permute.xlu0 %1031
  %1035 = vset.pattern.permute.xlu0 0
  %1036 = vperm.xlu0 %1035, %v946
  %v1037 = vpop.permute.xlu0 %1036
  %1040 = vset.pattern.permute.xlu0 0
  %1041 = vperm.xlu0 %1040, %v947
  %v1042 = vpop.permute.xlu0 %1041
  %1045 = vset.pattern.permute.xlu0 0
  %1046 = vperm.xlu0 %1045, %v948
  %v1047 = vpop.permute.xlu0 %1046
  %1050 = vset.pattern.permute.xlu0 0
  %1051 = vperm.xlu0 %1050, %v949
  %v1052 = vpop.permute.xlu0 %1051
  %1055 = vset.pattern.permute.xlu0 0
  %1056 = vperm.xlu0 %1055, %v950
  %v1057 = vpop.permute.xlu0 %1056
  %1060 = vset.pattern.permute.xlu0 0
  %1061 = vperm.xlu0 %1060, %v951
  %v1062 = vpop.permute.xlu0 %1061
  %1065 = vset.pattern.permute.xlu0 0
  %1066 = vperm.xlu0 %1065, %v952
  %v1067 = vpop.permute.xlu0 %1066
  %1070 = vset.pattern.permute.xlu0 0
  %1071 = vperm.xlu0 %1070, %v953
  %v1072 = vpop.permute.xlu0 %1071
  %1075 = vset.pattern.permute.xlu0 0
  %1076 = vperm.xlu0 %1075, %v954
  %v1077 = vpop.permute.xlu0 %1076
  %1080 = vset.pattern.permute.xlu0 0
  %1081 = vperm.xlu0 %1080, %v955
  %v1082 = vpop.permute.xlu0 %1081
  %1085 = vset.pattern.permute.xlu0 0
  %1086 = vperm.xlu0 %1085, %v956
  %v1087 = vpop.permute.xlu0 %1086
  %1090 = vset.pattern.permute.xlu0 0
  %1091 = vperm.xlu0 %1090, %v957
  %v1092 = vpop.permute.xlu0 %1091
  %1095 = vset.pattern.permute.xlu0 0
  %1096 = vperm.xlu0 %1095, %v958
  %v1097 = vpop.permute.xlu0 %1096
  %1100 = vset.pattern.permute.xlu0 0
  %1101 = vperm.xlu0 %1100, %v959
  %v1102 = vpop.permute.xlu0 %1101
  %1105 = vset.pattern.permute.xlu0 0
  %1106 = vperm.xlu0 %1105, %v960
  %v1107 = vpop.permute.xlu0 %1106
  %1110 = vset.pattern.permute.xlu0 0
  %1111 = vperm.xlu0 %1110, %v961
  %v1112 = vpop.permute.xlu0 %1111
  %1115 = vset.pattern.permute.xlu0 0
  %1116 = vperm.xlu0 %1115, %v962
  %v1117 = vpop.permute.xlu0 %1116
  %1120 = vset.pattern.permute.xlu0 0
  %1121 = vperm.xlu0 %1120, %v963
  %v1122 = vpop.permute.xlu0 %1121
  %1125 = vset.pattern.permute.xlu0 0
  %1126 = vperm.xlu0 %1125, %v964
  %v1127 = vpop.permute.xlu0 %1126
  %1130 = vset.pattern.permute.xlu0 0
  %1131 = vperm.xlu0 %1130, %v965
  %v1132 = vpop.permute.xlu0 %1131
  %1135 = vset.pattern.permute.xlu0 0
  %1136 = vperm.xlu0 %1135, %v966
  %v1137 = vpop.permute.xlu0 %1136
  %1140 = vset.pattern.permute.xlu0 0
  %1141 = vperm.xlu0 %1140, %v967
  %v1142 = vpop.permute.xlu0 %1141
  %1145 = vset.pattern.permute.xlu0 0
  %1146 = vperm.xlu0 %1145, %v968
  %v1147 = vpop.permute.xlu0 %1146
  %1150 = vset.pattern.permute.xlu0 0
  %1151 = vperm.xlu0 %1150, %v969
  %v1152 = vpop.permute.xlu0 %1151
  %1155 = vset.pattern.permute.xlu0 0
  %1156 = vperm.xlu0 %1155, %v970
  %v1157 = vpop.permute.xlu0 %1156
  %1160 = vset.pattern.permute.xlu0 0
  %1161 = vperm.xlu0 %1160, %v971
  %v1162 = vpop.permute.xlu0 %1161
  %1165 = vset.pattern.permute.xlu0 0
  %1166 = vperm.xlu0 %1165, %v972
  %v1167 = vpop.permute.xlu0 %1166
  %1170 = vset.pattern.permute.xlu0 0
  %1171 = vperm.xlu0 %1170, %v973
  %v1172 = vpop.permute.xlu0 %1171
  %1175 = vset.pattern.permute.xlu0 0
  %1176 = vperm.xlu0 %1175, %v974
  %v1177 = vpop.permute.xlu0 %1176
  %1180 = vset.pattern.permute.xlu0 0
  %1181 = vperm.xlu0 %1180, %v975
  %v1182 = vpop.permute.xlu0 %1181
  %1185 = vset.pattern.permute.xlu0 0
  %1186 = vperm.xlu0 %1185, %v976
  %v1187 = vpop.permute.xlu0 %1186
  %1190 = vset.pattern.permute.xlu0 0
  %1191 = vperm.xlu0 %1190, %v977
  %v1192 = vpop.permute.xlu0 %1191
  %1195 = vset.pattern.permute.xlu0 0
  %1196 = vperm.xlu0 %1195, %v978
  %v1197 = vpop.permute.xlu0 %1196
  %1200 = vset.pattern.permute.xlu0 0
  %1201 = vperm.xlu0 %1200, %v979
  %v1202 = vpop.permute.xlu0 %1201
  %1205 = vset.pattern.permute.xlu0 0
  %1206 = vperm.xlu0 %1205, %v980
  %v1207 = vpop.permute.xlu0 %1206
  %1210 = vset.pattern.permute.xlu0 0
  %1211 = vperm.xlu0 %1210, %v981
  %v1212 = vpop.permute.xlu0 %1211
  %1215 = vset.pattern.permute.xlu0 0
  %1216 = vperm.xlu0 %1215, %v982
  %v1217 = vpop.permute.xlu0 %1216
  %1220 = vset.pattern.permute.xlu0 0
  %1221 = vperm.xlu0 %1220, %v983
  %v1222 = vpop.permute.xlu0 %1221
  %1225 = vset.pattern.permute.xlu0 0
  %1226 = vperm.xlu0 %1225, %v984
  %v1227 = vpop.permute.xlu0 %1226
  %1230 = vset.pattern.permute.xlu0 0
  %1231 = vperm.xlu0 %1230, %v985
  %v1232 = vpop.permute.xlu0 %1231
  %1235 = vset.pattern.permute.xlu0 0
  %1236 = vperm.xlu0 %1235, %v986
  %v1237 = vpop.permute.xlu0 %1236
  %1240 = vset.pattern.permute.xlu0 0
  %1241 = vperm.xlu0 %1240, %v987
  %v1242 = vpop.permute.xlu0 %1241
  %1245 = vset.pattern.permute.xlu0 0
  %1246 = vperm.xlu0 %1245, %v988
  %v1247 = vpop.permute.xlu0 %1246
  %1250 = vset.pattern.permute.xlu0 0
  %1251 = vperm.xlu0 %1250, %v989
  %v1252 = vpop.permute.xlu0 %1251
  %1255 = vset.pattern.permute.xlu0 0
  %1256 = vperm.xlu0 %1255, %v990
  %v1257 = vpop.permute.xlu0 %1256
  %1260 = vset.pattern.permute.xlu0 0
  %1261 = vperm.xlu0 %1260, %v991
  %v1262 = vpop.permute.xlu0 %1261
  %1265 = vset.pattern.permute.xlu0 0
  %1266 = vperm.xlu0 %1265, %v992
  %v1267 = vpop.permute.xlu0 %1266
  %1270 = vset.pattern.permute.xlu0 0
  %1271 = vperm.xlu0 %1270, %v993
  %v1272 = vpop.permute.xlu0 %1271
  %1275 = vset.pattern.permute.xlu0 0
  %1276 = vperm.xlu0 %1275, %v994
  %v1277 = vpop.permute.xlu0 %1276
  %1280 = vset.pattern.permute.xlu0 0
  %1281 = vperm.xlu0 %1280, %v995
  %v1282 = vpop.permute.xlu0 %1281
  %1285 = vset.pattern.permute.xlu0 0
  %1286 = vperm.xlu0 %1285, %v996
  %v1287 = vpop.permute.xlu0 %1286
  %1290 = vset.pattern.permute.xlu0 0
  %1291 = vperm.xlu0 %1290, %v997
  %v1292 = vpop.permute.xlu0 %1291
  %1295 = vset.pattern.permute.xlu0 0
  %1296 = vperm.xlu0 %1295, %v998
  %v1297 = vpop.permute.xlu0 %1296
  %v1299 = vmul.f32 %v879, %v1002
  %v1300 = vmul.f32 %v880, %v1007
  %v1301 = vmul.f32 %v881, %v1012
  %v1302 = vmul.f32 %v882, %v1017
  %v1303 = vmul.f32 %v883, %v1022
  %v1304 = vmul.f32 %v884, %v1027
  %v1305 = vmul.f32 %v885, %v1032
  %v1306 = vmul.f32 %v886, %v1037
  %v1307 = vmul.f32 %v887, %v1042
  %v1308 = vmul.f32 %v888, %v1047
  %v1309 = vmul.f32 %v889, %v1052
  %v1310 = vmul.f32 %v890, %v1057
  %v1311 = vmul.f32 %v891, %v1062
  %v1312 = vmul.f32 %v892, %v1067
  %v1313 = vmul.f32 %v893, %v1072
  %v1314 = vmul.f32 %v894, %v1077
  %v1315 = vmul.f32 %v895, %v1082
  %v1316 = vmul.f32 %v896, %v1087
  %v1317 = vmul.f32 %v897, %v1092
  %v1318 = vmul.f32 %v898, %v1097
  %v1319 = vmul.f32 %v899, %v1102
  %v1320 = vmul.f32 %v900, %v1107
  %v1321 = vmul.f32 %v901, %v1112
  %v1322 = vmul.f32 %v902, %v1117
  %v1323 = vmul.f32 %v903, %v1122
  %v1324 = vmul.f32 %v904, %v1127
  %v1325 = vmul.f32 %v905, %v1132
  %v1326 = vmul.f32 %v906, %v1137
  %v1327 = vmul.f32 %v907, %v1142
  %v1328 = vmul.f32 %v908, %v1147
  %v1329 = vmul.f32 %v909, %v1152
  %v1330 = vmul.f32 %v910, %v1157
  %v1331 = vmul.f32 %v911, %v1162
  %v1332 = vmul.f32 %v912, %v1167
  %v1333 = vmul.f32 %v913, %v1172
  %v1334 = vmul.f32 %v914, %v1177
  %v1335 = vmul.f32 %v915, %v1182
  %v1336 = vmul.f32 %v916, %v1187
  %v1337 = vmul.f32 %v917, %v1192
  %v1338 = vmul.f32 %v918, %v1197
  %v1339 = vmul.f32 %v919, %v1202
  %v1340 = vmul.f32 %v920, %v1207
  %v1341 = vmul.f32 %v921, %v1212
  %v1342 = vmul.f32 %v922, %v1217
  %v1343 = vmul.f32 %v923, %v1222
  %v1344 = vmul.f32 %v924, %v1227
  %v1345 = vmul.f32 %v925, %v1232
  %v1346 = vmul.f32 %v926, %v1237
  %v1347 = vmul.f32 %v927, %v1242
  %v1348 = vmul.f32 %v928, %v1247
  %v1349 = vmul.f32 %v929, %v1252
  %v1350 = vmul.f32 %v930, %v1257
  %v1351 = vmul.f32 %v931, %v1262
  %v1352 = vmul.f32 %v932, %v1267
  %v1353 = vmul.f32 %v933, %v1272
  %v1354 = vmul.f32 %v934, %v1277
  %v1355 = vmul.f32 %v935, %v1282
  %v1356 = vmul.f32 %v936, %v1287
  %v1357 = vmul.f32 %v937, %v1292
  %v1358 = vmul.f32 %v938, %v1297
  %v1359 = vmax.f32 %v1299, %v1300
  %v1360 = vmax.f32 %v1301, %v1302
  %v1361 = vmax.f32 %v1303, %v1304
  %v1362 = vmax.f32 %v1305, %v1306
  %v1363 = vmax.f32 %v1307, %v1308
  %v1364 = vmax.f32 %v1309, %v1310
  %v1365 = vmax.f32 %v1311, %v1312
  %v1366 = vmax.f32 %v1329, %v1330
  %v1367 = vmax.f32 %v1331, %v1332
  %v1368 = vmax.f32 %v1333, %v1334
  %v1369 = vmax.f32 %v1335, %v1336
  %v1370 = vmax.f32 %v1337, %v1338
  %v1371 = vmax.f32 %v1339, %v1340
  %v1372 = vmax.f32 %v1341, %v1342
  %v1387 = vrot.slane %v1299, 1
  %v1388 = vrot.slane %v1301, 1
  %v1389 = vrot.slane %v1303, 1
  %v1390 = vrot.slane %v1305, 1
  %v1391 = vrot.slane %v1307, 1
  %v1392 = vrot.slane %v1309, 1
  %v1393 = vrot.slane %v1311, 1
  %v1394 = vrot.slane %v1329, 1
  %v1395 = vrot.slane %v1331, 1
  %v1396 = vrot.slane %v1333, 1
  %v1397 = vrot.slane %v1335, 1
  %v1398 = vrot.slane %v1337, 1
  %v1399 = vrot.slane %v1339, 1
  %v1400 = vrot.slane %v1341, 1
  %v1415 = vmax.f32 %v1359, %v1387
  %v1416 = vmax.f32 %v1360, %v1388
  %v1417 = vmax.f32 %v1361, %v1389
  %v1418 = vmax.f32 %v1362, %v1390
  %v1419 = vmax.f32 %v1363, %v1391
  %v1420 = vmax.f32 %v1364, %v1392
  %v1421 = vmax.f32 %v1365, %v1393
  %v1422 = vmax.f32 %v1366, %v1394
  %v1423 = vmax.f32 %v1367, %v1395
  %v1424 = vmax.f32 %v1368, %v1396
  %v1425 = vmax.f32 %v1369, %v1397
  %v1426 = vmax.f32 %v1370, %v1398
  %v1427 = vmax.f32 %v1371, %v1399
  %v1428 = vmax.f32 %v1372, %v1400
  %v1429 = vmax.f32 %v1415, %v1315
  %v1430 = vmax.f32 %v1416, %v1317
  %v1431 = vmax.f32 %v1417, %v1319
  %v1432 = vmax.f32 %v1418, %v1321
  %v1433 = vmax.f32 %v1419, %v1323
  %v1434 = vmax.f32 %v1420, %v1325
  %v1435 = vmax.f32 %v1421, %v1327
  %v1436 = vmax.f32 %v1422, %v1345
  %v1437 = vmax.f32 %v1423, %v1347
  %v1438 = vmax.f32 %v1424, %v1349
  %v1439 = vmax.f32 %v1425, %v1351
  %v1440 = vmax.f32 %v1426, %v1353
  %v1441 = vmax.f32 %v1427, %v1355
  %v1442 = vmax.f32 %v1428, %v1357
  %v1443 = vmax.f32 %v1429, %v1316
  %v1444 = vmax.f32 %v1430, %v1318
  %v1445 = vmax.f32 %v1431, %v1320
  %v1446 = vmax.f32 %v1432, %v1322
  %v1447 = vmax.f32 %v1433, %v1324
  %v1448 = vmax.f32 %v1434, %v1326
  %v1449 = vmax.f32 %v1435, %v1328
  %v1450 = vmax.f32 %v1436, %v1346
  %v1451 = vmax.f32 %v1437, %v1348
  %v1452 = vmax.f32 %v1438, %v1350
  %v1453 = vmax.f32 %v1439, %v1352
  %v1454 = vmax.f32 %v1440, %v1354
  %v1455 = vmax.f32 %v1441, %v1356
  %v1456 = vmax.f32 %v1442, %v1358
  %v1471 = vrot.slane %v1315, 1
  %v1472 = vrot.slane %v1317, 1
  %v1473 = vrot.slane %v1319, 1
  %v1474 = vrot.slane %v1321, 1
  %v1475 = vrot.slane %v1323, 1
  %v1476 = vrot.slane %v1325, 1
  %v1477 = vrot.slane %v1327, 1
  %v1478 = vrot.slane %v1345, 1
  %v1479 = vrot.slane %v1347, 1
  %v1480 = vrot.slane %v1349, 1
  %v1481 = vrot.slane %v1351, 1
  %v1482 = vrot.slane %v1353, 1
  %v1483 = vrot.slane %v1355, 1
  %v1484 = vrot.slane %v1357, 1
  %v1499 = vmax.f32 %v1443, %v1471
  %v1500 = vmax.f32 %v1444, %v1472
  %v1501 = vmax.f32 %v1445, %v1473
  %v1502 = vmax.f32 %v1446, %v1474
  %v1503 = vmax.f32 %v1447, %v1475
  %v1504 = vmax.f32 %v1448, %v1476
  %v1505 = vmax.f32 %v1449, %v1477
  %v1506 = vmax.f32 %v1450, %v1478
  %v1507 = vmax.f32 %v1451, %v1479
  %v1508 = vmax.f32 %v1452, %v1480
  %v1509 = vmax.f32 %v1453, %v1481
  %v1510 = vmax.f32 %v1454, %v1482
  %v1511 = vmax.f32 %v1455, %v1483
  %v1512 = vmax.f32 %v1456, %v1484
  %v1513 = vmax.f32 %v1499, %v1301
  %v1514 = vmax.f32 %v1500, %v1303
  %v1515 = vmax.f32 %v1501, %v1305
  %v1516 = vmax.f32 %v1502, %v1307
  %v1517 = vmax.f32 %v1503, %v1309
  %v1518 = vmax.f32 %v1504, %v1311
  %v1519 = vmax.f32 %v1505, %v1313
  %v1520 = vmax.f32 %v1506, %v1331
  %v1521 = vmax.f32 %v1507, %v1333
  %v1522 = vmax.f32 %v1508, %v1335
  %v1523 = vmax.f32 %v1509, %v1337
  %v1524 = vmax.f32 %v1510, %v1339
  %v1525 = vmax.f32 %v1511, %v1341
  %v1526 = vmax.f32 %v1512, %v1343
  %v1527 = vmax.f32 %v1513, %v1302
  %v1528 = vmax.f32 %v1514, %v1304
  %v1529 = vmax.f32 %v1515, %v1306
  %v1530 = vmax.f32 %v1516, %v1308
  %v1531 = vmax.f32 %v1517, %v1310
  %v1532 = vmax.f32 %v1518, %v1312
  %v1533 = vmax.f32 %v1519, %v1314
  %v1534 = vmax.f32 %v1520, %v1332
  %v1535 = vmax.f32 %v1521, %v1334
  %v1536 = vmax.f32 %v1522, %v1336
  %v1537 = vmax.f32 %v1523, %v1338
  %v1538 = vmax.f32 %v1524, %v1340
  %v1539 = vmax.f32 %v1525, %v1342
  %v1540 = vmax.f32 %v1526, %v1344
  %v1543 = vrot.slane %v1313, 1
  %v1544 = vrot.slane %v1343, 1
  %v1547 = vmax.f32 %v1527, %v1388
  %v1548 = vmax.f32 %v1528, %v1389
  %v1549 = vmax.f32 %v1529, %v1390
  %v1550 = vmax.f32 %v1530, %v1391
  %v1551 = vmax.f32 %v1531, %v1392
  %v1552 = vmax.f32 %v1532, %v1393
  %v1553 = vmax.f32 %v1533, %v1543
  %v1554 = vmax.f32 %v1534, %v1395
  %v1555 = vmax.f32 %v1535, %v1396
  %v1556 = vmax.f32 %v1536, %v1397
  %v1557 = vmax.f32 %v1537, %v1398
  %v1558 = vmax.f32 %v1538, %v1399
  %v1559 = vmax.f32 %v1539, %v1400
  %v1560 = vmax.f32 %v1540, %v1544
  %1561 = vst [vmem:[%s5] sm:$0x7f] %v1547
  %1562 = vst [vmem:[%s5 + $0x8] sm:$0x7f] %v1548
  %1563 = vst [vmem:[%s5 + $0x10] sm:$0x7f] %v1549
  %1564 = vst [vmem:[%s5 + $0x18] sm:$0x7f] %v1550
  %1565 = vst [vmem:[%s5 + $0x20] sm:$0x7f] %v1551
  %1566 = vst [vmem:[%s5 + $0x28] sm:$0x7f] %v1552
  %1567 = vst [vmem:[%s5 + $0x30] sm:$0x7f] %v1553
  %1568 = vst [vmem:[%s5 + $0x38] sm:$0x7f] %v1554
  %1569 = vst [vmem:[%s5 + $0x40] sm:$0x7f] %v1555
  %1570 = vst [vmem:[%s5 + $0x48] sm:$0x7f] %v1556
  %1571 = vst [vmem:[%s5 + $0x50] sm:$0x7f] %v1557
  %1572 = vst [vmem:[%s5 + $0x58] sm:$0x7f] %v1558
  %1573 = vst [vmem:[%s5 + $0x60] sm:$0x7f] %v1559
  %1574 = vst [vmem:[%s5 + $0x68] sm:$0x7f] %v1560
  // Predicated region
  $region22: #{fc_image_encoder_forward.1} parent=0 // pred_check
    _
  $region23: #{fc_image_encoder_forward.1} parent=0 // pred_check_branch
    %1576 = sbr.rel (0) target = $region25
  $region24: #{fc_image_encoder_forward.1} parent=0 // pred_region
    _
  $region25: #{fc_image_encoder_forward.1} parent=0 // pred_fallthru
    _
  // Predicated region
  $region26: #{fc_image_encoder_forward.1} parent=0 // pred_check
    _
  $region27: #{fc_image_encoder_forward.1} parent=0 // pred_check_branch
    %1578 = sbr.rel (0) target = $region29
  $region28: #{fc_image_encoder_forward.1} parent=0 // pred_region
    _
  $region29: #{fc_image_encoder_forward.1} parent=0 // pred_fallthru
    _

</llo_original>
